<compile_context>
chip_gen: v7x
topology: tpu7x:2x2x1
jax: 0.10.0
libtpu: 0.0.40
codegen_flags: <defaults>
</compile_context>

<pallas_src>
import functools

import jax
import jax.numpy as jnp
from jax.experimental import pallas as pl
from jax.experimental.pallas import tpu as pltpu


# --------------------------------- kernel -----------------------------------

def _proj_pool_kernel(*refs, block_size, mode, has_mask):
    """Fused linear + mask + block pooling for one (row-tile, lane-tile).

    refs (has_mask=True):  x_ref, m_ref, w_ref, b_ref, o_ref
    refs (has_mask=False): x_ref,        w_ref, b_ref, o_ref

    x_ref: (block_size, gt, H)  per-position activation slabs (compute dtype)
    m_ref: (block_size, gt, 1)  per-position mask slabs (f32)
    w_ref: (H, tn)              pre-transposed nn.Linear weight tile (in, out)
    b_ref: (1, tn)              bias tile (f32)
    o_ref: (gt, tn)             pooled output tile (lane-dense)
    """
    if has_mask:
        x_ref, m_ref, w_ref, b_ref, o_ref = refs
    else:
        x_ref, w_ref, b_ref, o_ref = refs
        m_ref = None

    w = w_ref[...]
    b = b_ref[...]                                   # (1, tn) f32

    if mode == "mean":
        # mean-pooling commutes with the affine map: pre-reduce on the VPU,
        # then ONE MXU matmul per tile (block_size x fewer matmul FLOPs).
        acc = None
        cnt = None
        for k in range(block_size):                  # small static unrolled loop
            xk = x_ref[k].astype(jnp.float32)        # (gt, H)
            if has_mask:
                mk = m_ref[k]                        # (gt, 1)
                xk = xk * mk
                cnt = mk if cnt is None else cnt + mk
            acc = xk if acc is None else acc + xk
        h = jnp.dot(acc.astype(w.dtype), w, preferred_element_type=jnp.float32)
        inv = 1.0 / block_size
        if has_mask:
            out = h * inv + b * (cnt * inv)          # exact: b * sum(mask)/bs
        else:
            out = h * inv + b
    else:  # 'max': one matmul per within-block position, max-reduced in regs
        out = None
        for k in range(block_size):
            hk = jnp.dot(x_ref[k], w, preferred_element_type=jnp.float32) + b
            if has_mask:
                hk = hk * m_ref[k]                   # mask applied after linear
            out = hk if out is None else jnp.maximum(out, hk)

    o_ref[...] = out.astype(o_ref.dtype)


# -------------------------------- wrapper ------------------------------------

def projection_forward(x, mask, params, *, projection="mean", block_size=4,
                       out_rows_per_tile=256, n_lane_tile=512,
                       compute_dtype=jnp.bfloat16):
    """Pallas forward of Projection for projection in {'mean', 'max'}.

    x: (B, T, H);  mask: (B, T) or None.
    params: {'w': (H, H) = torch_linear.weight.T, 'b': (H,)}.
    Returns (y, mask_out): y (B, T // block_size, H); mask_out or None.
    """
    assert projection in ("mean", "max")
    B, T, H = x.shape
    assert T % block_size == 0, "time dim must be a multiple of block_size"
    Tb = T // block_size
    R = B * T                      # total rows
    G = R // block_size            # total pooled (output) rows

    odt = jnp.dtype(x.dtype)
    cdt = jnp.dtype(compute_dtype)
    has_mask = mask is not None

    # ---- lane (output-feature) tiling of the weight ------------------------
    if H <= n_lane_tile:
        tn = H                                    # full hidden on the lanes
    else:
        tn = max(128, (n_lane_tile // 128) * 128)
    num_j = pl.cdiv(H, tn)

    # ---- generation-aware row-tile sizing / VMEM budgeting ------------------
    try:
        vmem_cap = int(pltpu.get_tpu_info().vmem_capacity_bytes)
    except Exception:  # pragma: no cover - conservative fallback
        vmem_cap = 64 * 1024 * 1024
    budget = vmem_cap // 2

    def tile_bytes(g):
        byt = 2 * block_size * g * H * cdt.itemsize                 # x block
        byt += (1 if num_j == 1 else 2) * H * tn * cdt.itemsize     # weight
        byt += 2 * tn * 4                                           # bias
        byt += 2 * g * tn * odt.itemsize                            # out block
        if has_mask:
            byt += 2 * block_size * g * 4                           # mask block
        return byt

    gt0 = min(out_rows_per_tile, G)
    if gt0 == G and (G % 8 == 0 or G <= 8):
        gt = G                                    # single exact-extent tile
    else:
        gt = max(8, (gt0 // 8) * 8)               # (8,128)-friendly tiles
    while gt > 8 and tile_bytes(gt) > budget:
        gt = max(8, (gt // 2 // 8) * 8)
    num_i = pl.cdiv(G, gt)

    vmem_limit = int(min(vmem_cap * 3 // 4,
                         max(32 * 1024 * 1024, 2 * tile_bytes(gt))))

    # ---- inputs: cast + permute to (block_size, G, ...) slabs ---------------
    # (fuses with the bf16 cast into a single XLA pass; pure layout plumbing so
    #  the kernel gets unit-stride per-position slabs instead of strided loads)
    xp = (x.reshape(B, Tb, block_size, H)
           .transpose(2, 0, 1, 3)
           .reshape(block_size, G, H)
           .astype(cdt))
    inputs = [xp]
    if has_mask:
        mp = (mask.reshape(B, Tb, block_size)
                  .transpose(2, 0, 1)
                  .reshape(block_size, G, 1)
                  .astype(jnp.float32))
        inputs.append(mp)
    inputs += [params["w"].astype(cdt),
               params["b"].reshape(1, H).astype(jnp.float32)]

    kernel = functools.partial(_proj_pool_kernel, block_size=block_size,
                               mode=projection, has_mask=has_mask)

    if projection == "mean":
        flops = 2 * G * H * H + block_size * G * H
    else:
        flops = 2 * R * H * H
    bytes_accessed = (R * H * cdt.itemsize
                      + (num_i if num_j > 1 else 1) * H * H * cdt.itemsize
                      + H * 4 + G * H * odt.itemsize
                      + (R * 4 if has_mask else 0))
    cost = pl.CostEstimate(flops=int(flops), transcendentals=0,
                           bytes_accessed=int(bytes_accessed))

    def _build(single_buffer_consts):
        const_kw = (dict(pipeline_mode=pl.Buffered(1))
                    if single_buffer_consts else {})
        in_specs = [pl.BlockSpec((block_size, gt, H), lambda i, j: (0, i, 0))]
        if has_mask:
            in_specs.append(
                pl.BlockSpec((block_size, gt, 1), lambda i, j: (0, i, 0)))
        in_specs += [
            pl.BlockSpec((H, tn), lambda i, j: (0, j), **const_kw),   # weight
            pl.BlockSpec((1, tn), lambda i, j: (0, j), **const_kw),   # bias
        ]
        return pl.pallas_call(
            kernel,
            out_shape=jax.ShapeDtypeStruct((G, H), odt),
            grid_spec=pltpu.PrefetchScalarGridSpec(
                num_scalar_prefetch=0,
                grid=(num_i, num_j),          # j innermost -> x block re-used
                in_specs=in_specs,
                out_specs=pl.BlockSpec((gt, tn), lambda i, j: (i, j)),
            ),
            compiler_params=pltpu.CompilerParams(
                dimension_semantics=("parallel", "arbitrary"),
                vmem_limit_bytes=vmem_limit,
            ),
            cost_estimate=cost,
        )

    try:
        out = _build(single_buffer_consts=(num_j == 1))(*inputs)
    except Exception:
        # pl.Buffered(1) not accepted on this jax build -> default buffering.
        out = _build(single_buffer_consts=False)(*inputs)

    y = out.reshape(B, Tb, H)

    if not has_mask:
        return y, None
    m_out = jnp.clip(mask.reshape(B, Tb, block_size).sum(-1), 0.0, 1.0)
    return y, m_out


# --------------------------- reference (pure JAX) -----------------------------

def projection_forward_ref(x, mask, params, *, projection, block_size):
    B, T, H = x.shape
    h = x @ params["w"] + params["b"]
    if mask is not None:
        h = h * mask[..., None]
    hb = h.reshape(B, T // block_size, block_size, H)
    y = hb.mean(axis=2) if projection == "mean" else hb.max(axis=2)
    if mask is None:
        return y, None
    m_out = jnp.clip(mask.reshape(B, -1, block_size).sum(-1), 0.0, 1.0)
    return y, m_out


# ---------------------------------- main --------------------------------------

if __name__ == "__main__":
    B, T, H, BS = 2, 8, 32, 4       # n_blocks = T // BS = 2

    key = jax.random.PRNGKey(0)
    kx, km, kw, kb = jax.random.split(key, 4)
    x = jax.random.normal(kx, (B, T, H), jnp.float32)
    mask = (jax.random.uniform(km, (B, T)) > 0.3).astype(jnp.float32)
    params = {
        "w": 0.05 * jax.random.normal(kw, (H, H), jnp.float32),  # torch W.T
        "b": 0.05 * jax.random.normal(kb, (H,), jnp.float32),
    }

    # bf16 MXU inputs with f32 accumulation -> loose-ish tolerance.
    TOL = dict(rtol=2e-2, atol=2e-2)

    # --- 'mean' and 'max' projections, with mask ---
    for mode in ("mean", "max"):
        y, m_out = projection_forward(x, mask, params,
                                      projection=mode, block_size=BS)
        y = jax.block_until_ready(y)
        y_ref, m_ref = projection_forward_ref(x, mask, params,
                                              projection=mode, block_size=BS)
        assert y.shape == (B, T // BS, H)
        assert jnp.allclose(y, y_ref, **TOL), f"{mode} output mismatch"
        assert jnp.allclose(m_out, m_ref), f"{mode} mask mismatch"

    # --- mask=None specialization (no mask operand / multiply) ---
    y0, m0 = projection_forward(x, None, params, projection="mean",
                                block_size=BS)
    jax.block_until_ready(y0)
    y0_ref, _ = projection_forward_ref(x, None, params,
                                       projection="mean", block_size=BS)
    assert m0 is None
    assert jnp.allclose(y0, y0_ref, **TOL)

    # --- multi-row-tile + ragged tail (G=20, gt=8 -> 3 grid steps, no pad) ---
    T2 = 40
    kx2, km2 = jax.random.split(jax.random.PRNGKey(1))
    x2 = jax.random.normal(kx2, (B, T2, H), jnp.float32)
    mask2 = (jax.random.uniform(km2, (B, T2)) > 0.3).astype(jnp.float32)
    y2, m2 = projection_forward(x2, mask2, params, projection="max",
                                block_size=BS, out_rows_per_tile=8)
    y2 = jax.block_until_ready(y2)
    y2_ref, m2_ref = projection_forward_ref(x2, mask2, params,
                                            projection="max", block_size=BS)
    assert y2.shape == (B, T2 // BS, H)
    assert jnp.allclose(y2, y2_ref, **TOL)
    assert jnp.allclose(m2, m2_ref)

    # --- output-feature (N) tiling of the weight (H=256, 128-lane tiles) ---
    H3 = 256
    kx3, kw3, kb3, km3 = jax.random.split(jax.random.PRNGKey(2), 4)
    x3 = jax.random.normal(kx3, (B, T, H3), jnp.float32)
    mask3 = (jax.random.uniform(km3, (B, T)) > 0.3).astype(jnp.float32)
    params3 = {
        "w": 0.05 * jax.random.normal(kw3, (H3, H3), jnp.float32),
        "b": 0.05 * jax.random.normal(kb3, (H3,), jnp.float32),
    }
    y3, m3 = projection_forward(x3, mask3, params3, projection="mean",
                                block_size=BS, n_lane_tile=128)
    y3 = jax.block_until_ready(y3)
    y3_ref, m3_ref = projection_forward_ref(x3, mask3, params3,
                                            projection="mean", block_size=BS)
    assert y3.shape == (B, T // BS, H3)
    assert jnp.allclose(y3, y3_ref, **TOL)
    assert jnp.allclose(m3, m3_ref)

    print("KERNEL_OK")
</pallas_src>

<mosaic_0001>
module attributes {stable_mosaic.version = 11 : i64} {
  func.func @_proj_pool_kernel(%arg0: i32, %arg1: i32, %arg2: memref<4x4x32xbf16, #tpu.memory_space<vmem>>, %arg3: memref<4x4x1xf32, #tpu.memory_space<vmem>>, %arg4: memref<32x32xbf16, #tpu.memory_space<vmem>>, %arg5: memref<1x32xf32, #tpu.memory_space<vmem>>, %arg6: memref<4x32xf32, #tpu.memory_space<vmem>>) attributes {dimension_semantics = [#tpu.dimension_semantics<parallel>, #tpu.dimension_semantics<arbitrary>], iteration_bounds = array<i64: 1, 1>, scalar_prefetch = 0 : i64, scratch_operands = 0 : i64, tpu.core_type = #tpu.core_type<tc>, window_params = [{transform_indices = @transform_0, window_bounds = array<i64: 4, 4, 32>}, {transform_indices = @transform_1, window_bounds = array<i64: 4, 4, 1>}, {pipeline_mode = #tpu.pipeline_mode<synchronous>, transform_indices = @transform_2, window_bounds = array<i64: 32, 32>}, {pipeline_mode = #tpu.pipeline_mode<synchronous>, transform_indices = @transform_3, window_bounds = array<i64: 1, 32>}, {transform_indices = @transform_4, window_bounds = array<i64: 4, 32>}]} {
    %c0 = arith.constant 0 : index
    %c0_0 = arith.constant 0 : index
    %0 = vector.load %arg4[%c0, %c0_0] : memref<32x32xbf16, #tpu.memory_space<vmem>>, vector<32x32xbf16>
    %c0_1 = arith.constant 0 : index
    %c0_2 = arith.constant 0 : index
    %1 = vector.load %arg5[%c0_1, %c0_2] : memref<1x32xf32, #tpu.memory_space<vmem>>, vector<1x32xf32>
    %c0_3 = arith.constant 0 : index
    %c0_4 = arith.constant 0 : index
    %c0_5 = arith.constant 0 : index
    %2 = vector.load %arg2[%c0_3, %c0_4, %c0_5] : memref<4x4x32xbf16, #tpu.memory_space<vmem>>, vector<1x4x32xbf16>
    %3 = vector.shape_cast %2 : vector<1x4x32xbf16> to vector<4x32xbf16>
    %4 = arith.extf %3 : vector<4x32xbf16> to vector<4x32xf32>
    %c0_6 = arith.constant 0 : index
    %c0_7 = arith.constant 0 : index
    %c0_8 = arith.constant 0 : index
    %5 = vector.load %arg3[%c0_6, %c0_7, %c0_8] : memref<4x4x1xf32, #tpu.memory_space<vmem>>, vector<1x4x1xf32>
    %6 = vector.shape_cast %5 : vector<1x4x1xf32> to vector<4x1xf32>
    %7 = vector.broadcast %6 : vector<4x1xf32> to vector<4x32xf32>
    %8 = arith.mulf %4, %7 : vector<4x32xf32>
    %c1 = arith.constant 1 : index
    %c0_9 = arith.constant 0 : index
    %c0_10 = arith.constant 0 : index
    %9 = vector.load %arg2[%c1, %c0_9, %c0_10] : memref<4x4x32xbf16, #tpu.memory_space<vmem>>, vector<1x4x32xbf16>
    %10 = vector.shape_cast %9 : vector<1x4x32xbf16> to vector<4x32xbf16>
    %11 = arith.extf %10 : vector<4x32xbf16> to vector<4x32xf32>
    %c1_11 = arith.constant 1 : index
    %c0_12 = arith.constant 0 : index
    %c0_13 = arith.constant 0 : index
    %12 = vector.load %arg3[%c1_11, %c0_12, %c0_13] : memref<4x4x1xf32, #tpu.memory_space<vmem>>, vector<1x4x1xf32>
    %13 = vector.shape_cast %12 : vector<1x4x1xf32> to vector<4x1xf32>
    %14 = vector.broadcast %13 : vector<4x1xf32> to vector<4x32xf32>
    %15 = arith.mulf %11, %14 : vector<4x32xf32>
    %16 = arith.addf %6, %13 : vector<4x1xf32>
    %17 = arith.addf %8, %15 : vector<4x32xf32>
    %c2 = arith.constant 2 : index
    %c0_14 = arith.constant 0 : index
    %c0_15 = arith.constant 0 : index
    %18 = vector.load %arg2[%c2, %c0_14, %c0_15] : memref<4x4x32xbf16, #tpu.memory_space<vmem>>, vector<1x4x32xbf16>
    %19 = vector.shape_cast %18 : vector<1x4x32xbf16> to vector<4x32xbf16>
    %20 = arith.extf %19 : vector<4x32xbf16> to vector<4x32xf32>
    %c2_16 = arith.constant 2 : index
    %c0_17 = arith.constant 0 : index
    %c0_18 = arith.constant 0 : index
    %21 = vector.load %arg3[%c2_16, %c0_17, %c0_18] : memref<4x4x1xf32, #tpu.memory_space<vmem>>, vector<1x4x1xf32>
    %22 = vector.shape_cast %21 : vector<1x4x1xf32> to vector<4x1xf32>
    %23 = vector.broadcast %22 : vector<4x1xf32> to vector<4x32xf32>
    %24 = arith.mulf %20, %23 : vector<4x32xf32>
    %25 = arith.addf %16, %22 : vector<4x1xf32>
    %26 = arith.addf %17, %24 : vector<4x32xf32>
    %c3 = arith.constant 3 : index
    %c0_19 = arith.constant 0 : index
    %c0_20 = arith.constant 0 : index
    %27 = vector.load %arg2[%c3, %c0_19, %c0_20] : memref<4x4x32xbf16, #tpu.memory_space<vmem>>, vector<1x4x32xbf16>
    %28 = vector.shape_cast %27 : vector<1x4x32xbf16> to vector<4x32xbf16>
    %29 = arith.extf %28 : vector<4x32xbf16> to vector<4x32xf32>
    %c3_21 = arith.constant 3 : index
    %c0_22 = arith.constant 0 : index
    %c0_23 = arith.constant 0 : index
    %30 = vector.load %arg3[%c3_21, %c0_22, %c0_23] : memref<4x4x1xf32, #tpu.memory_space<vmem>>, vector<1x4x1xf32>
    %31 = vector.shape_cast %30 : vector<1x4x1xf32> to vector<4x1xf32>
    %32 = vector.broadcast %31 : vector<4x1xf32> to vector<4x32xf32>
    %33 = arith.mulf %29, %32 : vector<4x32xf32>
    %34 = arith.addf %25, %31 : vector<4x1xf32>
    %35 = arith.addf %26, %33 : vector<4x32xf32>
    %36 = arith.truncf %35 : vector<4x32xf32> to vector<4x32xbf16>
    %cst = arith.constant dense<0.000000e+00> : vector<4x32xf32>
    %37 = tpu.matmul %36, %0, %cst {dimension_numbers = #tpu.dot_dimension_numbers<[1], [0], [0], [1], [0, 0, 1, 1], [], []>} : vector<4x32xbf16>, vector<32x32xbf16>, vector<4x32xf32> -> vector<4x32xf32>
    %cst_24 = arith.constant 2.500000e-01 : f32
    %38 = vector.broadcast %cst_24 : f32 to vector<4x32xf32>
    %39 = arith.mulf %37, %38 : vector<4x32xf32>
    %cst_25 = arith.constant 2.500000e-01 : f32
    %40 = vector.broadcast %cst_25 : f32 to vector<4x1xf32>
    %41 = arith.mulf %34, %40 : vector<4x1xf32>
    %42 = vector.broadcast %1 : vector<1x32xf32> to vector<4x32xf32>
    %43 = vector.broadcast %41 : vector<4x1xf32> to vector<4x32xf32>
    %44 = arith.mulf %42, %43 : vector<4x32xf32>
    %45 = arith.addf %39, %44 : vector<4x32xf32>
    %c0_26 = arith.constant 0 : index
    %c0_27 = arith.constant 0 : index
    %46 = vector.load %arg6[%c0_26, %c0_27] : memref<4x32xf32, #tpu.memory_space<vmem>>, vector<4x32xf32>
    tpu.vector_store %arg6[%c0_26, %c0_27], %45 {strides = array<i32>} : memref<4x32xf32, #tpu.memory_space<vmem>>, vector<4x32xf32>,
    return
  }
  func.func @transform_0(%arg0: i32, %arg1: i32) -> (i32, i32, i32) {
    %c0_i32 = arith.constant 0 : i32
    %c0_i32_0 = arith.constant 0 : i32
    %c0_i32_1 = arith.constant 0 : i32
    return %c0_i32, %arg0, %c0_i32_0 : i32, i32, i32
  }
  func.func @transform_1(%arg0: i32, %arg1: i32) -> (i32, i32, i32) {
    %c0_i32 = arith.constant 0 : i32
    %c0_i32_0 = arith.constant 0 : i32
    %c0_i32_1 = arith.constant 0 : i32
    return %c0_i32, %arg0, %c0_i32_0 : i32, i32, i32
  }
  func.func @transform_2(%arg0: i32, %arg1: i32) -> (i32, i32) {
    %c0_i32 = arith.constant 0 : i32
    %c0_i32_0 = arith.constant 0 : i32
    return %c0_i32, %arg1 : i32, i32
  }
  func.func @transform_3(%arg0: i32, %arg1: i32) -> (i32, i32) {
    %c0_i32 = arith.constant 0 : i32
    %c0_i32_0 = arith.constant 0 : i32
    return %c0_i32, %arg1 : i32, i32
  }
  func.func @transform_4(%arg0: i32, %arg1: i32) -> (i32, i32) {
    %c0_i32 = arith.constant 0 : i32
    return %arg0, %arg1 : i32, i32
  }
}

module attributes {stable_mosaic.version = 11 : i64} {
  func.func @_proj_pool_kernel(%arg0: i32, %arg1: i32, %arg2: memref<4x4x32xbf16, #tpu.memory_space<vmem>>, %arg3: memref<4x4x1xf32, #tpu.memory_space<vmem>>, %arg4: memref<32x32xbf16, #tpu.memory_space<vmem>>, %arg5: memref<1x32xf32, #tpu.memory_space<vmem>>, %arg6: memref<4x32xf32, #tpu.memory_space<vmem>>) attributes {dimension_semantics = [#tpu.dimension_semantics<parallel>, #tpu.dimension_semantics<arbitrary>], iteration_bounds = array<i64: 1, 1>, scalar_prefetch = 0 : i64, scratch_operands = 0 : i64, tpu.core_type = #tpu.core_type<tc>, window_params = [{transform_indices = @transform_0, window_bounds = array<i64: 4, 4, 32>}, {transform_indices = @transform_1, window_bounds = array<i64: 4, 4, 1>}, {transform_indices = @transform_2, window_bounds = array<i64: 32, 32>}, {transform_indices = @transform_3, window_bounds = array<i64: 1, 32>}, {transform_indices = @transform_4, window_bounds = array<i64: 4, 32>}]} {
    %c0 = arith.constant 0 : index
    %c0_0 = arith.constant 0 : index
    %0 = vector.load %arg4[%c0, %c0_0] : memref<32x32xbf16, #tpu.memory_space<vmem>>, vector<32x32xbf16>
    %c0_1 = arith.constant 0 : index
    %c0_2 = arith.constant 0 : index
    %1 = vector.load %arg5[%c0_1, %c0_2] : memref<1x32xf32, #tpu.memory_space<vmem>>, vector<1x32xf32>
    %c0_3 = arith.constant 0 : index
    %c0_4 = arith.constant 0 : index
    %c0_5 = arith.constant 0 : index
    %2 = vector.load %arg2[%c0_3, %c0_4, %c0_5] : memref<4x4x32xbf16, #tpu.memory_space<vmem>>, vector<1x4x32xbf16>
    %3 = vector.shape_cast %2 : vector<1x4x32xbf16> to vector<4x32xbf16>
    %4 = arith.extf %3 : vector<4x32xbf16> to vector<4x32xf32>
    %c0_6 = arith.constant 0 : index
    %c0_7 = arith.constant 0 : index
    %c0_8 = arith.constant 0 : index
    %5 = vector.load %arg3[%c0_6, %c0_7, %c0_8] : memref<4x4x1xf32, #tpu.memory_space<vmem>>, vector<1x4x1xf32>
    %6 = vector.shape_cast %5 : vector<1x4x1xf32> to vector<4x1xf32>
    %7 = vector.broadcast %6 : vector<4x1xf32> to vector<4x32xf32>
    %8 = arith.mulf %4, %7 : vector<4x32xf32>
    %c1 = arith.constant 1 : index
    %c0_9 = arith.constant 0 : index
    %c0_10 = arith.constant 0 : index
    %9 = vector.load %arg2[%c1, %c0_9, %c0_10] : memref<4x4x32xbf16, #tpu.memory_space<vmem>>, vector<1x4x32xbf16>
    %10 = vector.shape_cast %9 : vector<1x4x32xbf16> to vector<4x32xbf16>
    %11 = arith.extf %10 : vector<4x32xbf16> to vector<4x32xf32>
    %c1_11 = arith.constant 1 : index
    %c0_12 = arith.constant 0 : index
    %c0_13 = arith.constant 0 : index
    %12 = vector.load %arg3[%c1_11, %c0_12, %c0_13] : memref<4x4x1xf32, #tpu.memory_space<vmem>>, vector<1x4x1xf32>
    %13 = vector.shape_cast %12 : vector<1x4x1xf32> to vector<4x1xf32>
    %14 = vector.broadcast %13 : vector<4x1xf32> to vector<4x32xf32>
    %15 = arith.mulf %11, %14 : vector<4x32xf32>
    %16 = arith.addf %6, %13 : vector<4x1xf32>
    %17 = arith.addf %8, %15 : vector<4x32xf32>
    %c2 = arith.constant 2 : index
    %c0_14 = arith.constant 0 : index
    %c0_15 = arith.constant 0 : index
    %18 = vector.load %arg2[%c2, %c0_14, %c0_15] : memref<4x4x32xbf16, #tpu.memory_space<vmem>>, vector<1x4x32xbf16>
    %19 = vector.shape_cast %18 : vector<1x4x32xbf16> to vector<4x32xbf16>
    %20 = arith.extf %19 : vector<4x32xbf16> to vector<4x32xf32>
    %c2_16 = arith.constant 2 : index
    %c0_17 = arith.constant 0 : index
    %c0_18 = arith.constant 0 : index
    %21 = vector.load %arg3[%c2_16, %c0_17, %c0_18] : memref<4x4x1xf32, #tpu.memory_space<vmem>>, vector<1x4x1xf32>
    %22 = vector.shape_cast %21 : vector<1x4x1xf32> to vector<4x1xf32>
    %23 = vector.broadcast %22 : vector<4x1xf32> to vector<4x32xf32>
    %24 = arith.mulf %20, %23 : vector<4x32xf32>
    %25 = arith.addf %16, %22 : vector<4x1xf32>
    %26 = arith.addf %17, %24 : vector<4x32xf32>
    %c3 = arith.constant 3 : index
    %c0_19 = arith.constant 0 : index
    %c0_20 = arith.constant 0 : index
    %27 = vector.load %arg2[%c3, %c0_19, %c0_20] : memref<4x4x32xbf16, #tpu.memory_space<vmem>>, vector<1x4x32xbf16>
    %28 = vector.shape_cast %27 : vector<1x4x32xbf16> to vector<4x32xbf16>
    %29 = arith.extf %28 : vector<4x32xbf16> to vector<4x32xf32>
    %c3_21 = arith.constant 3 : index
    %c0_22 = arith.constant 0 : index
    %c0_23 = arith.constant 0 : index
    %30 = vector.load %arg3[%c3_21, %c0_22, %c0_23] : memref<4x4x1xf32, #tpu.memory_space<vmem>>, vector<1x4x1xf32>
    %31 = vector.shape_cast %30 : vector<1x4x1xf32> to vector<4x1xf32>
    %32 = vector.broadcast %31 : vector<4x1xf32> to vector<4x32xf32>
    %33 = arith.mulf %29, %32 : vector<4x32xf32>
    %34 = arith.addf %25, %31 : vector<4x1xf32>
    %35 = arith.addf %26, %33 : vector<4x32xf32>
    %36 = arith.truncf %35 : vector<4x32xf32> to vector<4x32xbf16>
    %cst = arith.constant dense<0.000000e+00> : vector<4x32xf32>
    %37 = tpu.matmul %36, %0, %cst {dimension_numbers = #tpu.dot_dimension_numbers<[1], [0], [0], [1], [0, 0, 1, 1], [], []>} : vector<4x32xbf16>, vector<32x32xbf16>, vector<4x32xf32> -> vector<4x32xf32>
    %cst_24 = arith.constant 2.500000e-01 : f32
    %38 = vector.broadcast %cst_24 : f32 to vector<4x32xf32>
    %39 = arith.mulf %37, %38 : vector<4x32xf32>
    %cst_25 = arith.constant 2.500000e-01 : f32
    %40 = vector.broadcast %cst_25 : f32 to vector<4x1xf32>
    %41 = arith.mulf %34, %40 : vector<4x1xf32>
    %42 = vector.broadcast %1 : vector<1x32xf32> to vector<4x32xf32>
    %43 = vector.broadcast %41 : vector<4x1xf32> to vector<4x32xf32>
    %44 = arith.mulf %42, %43 : vector<4x32xf32>
    %45 = arith.addf %39, %44 : vector<4x32xf32>
    %c0_26 = arith.constant 0 : index
    %c0_27 = arith.constant 0 : index
    %46 = vector.load %arg6[%c0_26, %c0_27] : memref<4x32xf32, #tpu.memory_space<vmem>>, vector<4x32xf32>
    tpu.vector_store %arg6[%c0_26, %c0_27], %45 {strides = array<i32>} : memref<4x32xf32, #tpu.memory_space<vmem>>, vector<4x32xf32>,
    return
  }
  func.func @transform_0(%arg0: i32, %arg1: i32) -> (i32, i32, i32) {
    %c0_i32 = arith.constant 0 : i32
    %c0_i32_0 = arith.constant 0 : i32
    %c0_i32_1 = arith.constant 0 : i32
    return %c0_i32, %arg0, %c0_i32_0 : i32, i32, i32
  }
  func.func @transform_1(%arg0: i32, %arg1: i32) -> (i32, i32, i32) {
    %c0_i32 = arith.constant 0 : i32
    %c0_i32_0 = arith.constant 0 : i32
    %c0_i32_1 = arith.constant 0 : i32
    return %c0_i32, %arg0, %c0_i32_0 : i32, i32, i32
  }
  func.func @transform_2(%arg0: i32, %arg1: i32) -> (i32, i32) {
    %c0_i32 = arith.constant 0 : i32
    %c0_i32_0 = arith.constant 0 : i32
    return %c0_i32, %arg1 : i32, i32
  }
  func.func @transform_3(%arg0: i32, %arg1: i32) -> (i32, i32) {
    %c0_i32 = arith.constant 0 : i32
    %c0_i32_0 = arith.constant 0 : i32
    return %c0_i32, %arg1 : i32, i32
  }
  func.func @transform_4(%arg0: i32, %arg1: i32) -> (i32, i32) {
    %c0_i32 = arith.constant 0 : i32
    return %arg0, %arg1 : i32, i32
  }
}

</mosaic_0001>

<llo_original>
// kernel: tpu_custom_call.1
$region0: #{tpu_custom_call.1}
  #allocation0 [shape = 'u32[]', space=smem, size = 0x4, offset = 0x4, fixed_abs, tag = 'smem constant byte address 0x4 - core index']
  #allocation1 [shape = 'u32[144,128]{1,0:T(1,128)}', space=vmem, size = 0x12000, scoped, tag = 'internal scratch']
  %s0 = inlined_call_operand.vmem [shape: bf16[4,4,32], index: 0, kind: input, shape index: {}]
  %s1 = inlined_call_operand.vmem [shape: f32[4,4,1], index: 1, kind: input, shape index: {}]
  %s2 = inlined_call_operand.vmem [shape: bf16[32,32], index: 2, kind: input, shape index: {}]
  %s3 = inlined_call_operand.vmem [shape: f32[1,32], index: 3, kind: input, shape index: {}]
  %s4 = inlined_call_operand.hbm [shape: f32[4,32], index: 4, kind: output, shape index: {}]
  %s5 = sld [smem:[#allocation0]]
  $region26: #{tpu_custom_call.1} parent=0
    _
  %s7 = ssub.s32 1, %s5
  %s8 = scalar_select 0, %s7, %s5
  $region1: #{tpu_custom_call.1} parent=0
    #allocation2 [shape = 'u8[2048]{0}', space=vmem, size = 0x800, scoped, tag = 'output window, operand 0, single buffered']
    #allocation3 [shape = 's32[1]{0}', space=sflag, size = 0x4, scoped, tag = 'scoped memory for tpu_custom_call.1']
    %9 = vsyncpa [#allocation3], 0
    // Predicated region
    $region2: #{tpu_custom_call.1} parent=1 // pred_check
      _
    $region3: #{tpu_custom_call.1} parent=1 // pred_check_branch
      %11 = sbr.rel (0) target = $region5
    $region4: #{tpu_custom_call.1} parent=1 // pred_region
      _
    $region5: #{tpu_custom_call.1} parent=1 // pred_fallthru
      _
    // Predicated region
    $region6: #{tpu_custom_call.1} parent=1 // pred_check
      _
    $region7: #{tpu_custom_call.1} parent=1 // pred_check_branch
      %13 = sbr.rel (0) target = $region9
    $region8: #{tpu_custom_call.1} parent=1 // pred_region
      _
    $region9: #{tpu_custom_call.1} parent=1 // pred_fallthru
      _
    // Predicated region
    $region10: #{tpu_custom_call.1} parent=1 // pred_check
      _
    $region11: #{tpu_custom_call.1} parent=1 // pred_check_branch
      %15 = sbr.rel (0) target = $region13
    $region12: #{tpu_custom_call.1} parent=1 // pred_region
      _
    $region13: #{tpu_custom_call.1} parent=1 // pred_fallthru
      _
    // Predicated region
    $region14: #{tpu_custom_call.1} parent=1 // pred_check
      _
    $region15: #{tpu_custom_call.1} parent=1 // pred_check_branch
      %17 = sbr.rel (0) target = $region17
    $region16: #{tpu_custom_call.1} parent=1 // pred_region
      _
    $region17: #{tpu_custom_call.1} parent=1 // pred_fallthru
      _
    %v19 = vld [vmem:[%s2] sm:$0xf]
    %v20 = vld [vmem:[%s2 + $0x4] sm:$0xf]
    %v21 = vld [vmem:[%s2 + $0x8] sm:$0xf]
    %v22 = vld [vmem:[%s2 + $0xc] sm:$0xf]
    %v23 = vld [vmem:[%s3] sm:$0x1]
    %v24 = vld [vmem:[%s0] sm:$0x3]
    %v25 = vunpack.c.l.bf16 %v24
    %v26 = vld [vmem:[%s1] sm:$0xf]
    %28 = vset.pattern.permute.xlu0 0
    %29 = vperm.xlu0 %28, %v26
    %v30 = vpop.permute.xlu0 %29
    %v32 = vmul.f32 %v25, %v30
    %s33 = scalar_lea.vmem %s0, 2
    %v34 = vld [vmem:[%s33] sm:$0x3]
    %v35 = vunpack.c.l.bf16 %v34
    %s36 = scalar_lea.vmem %s1, 4
    %v37 = vld [vmem:[%s36] sm:$0xf]
    %39 = vset.pattern.permute.xlu0 0
    %40 = vperm.xlu0 %39, %v37
    %v41 = vpop.permute.xlu0 %40
    %v43 = vmul.f32 %v35, %v41
    %v44 = vadd.f32 %v26, %v37
    %v45 = vadd.f32 %v32, %v43
    %s46 = scalar_lea.vmem %s0, 4
    %v47 = vld [vmem:[%s46] sm:$0x3]
    %v48 = vunpack.c.l.bf16 %v47
    %s49 = scalar_lea.vmem %s1, 8
    %v50 = vld [vmem:[%s49] sm:$0xf]
    %52 = vset.pattern.permute.xlu0 0
    %53 = vperm.xlu0 %52, %v50
    %v54 = vpop.permute.xlu0 %53
    %v56 = vmul.f32 %v48, %v54
    %v57 = vadd.f32 %v44, %v50
    %v58 = vadd.f32 %v45, %v56
    %s59 = scalar_lea.vmem %s0, 6
    %v60 = vld [vmem:[%s59] sm:$0x3]
    %v61 = vunpack.c.l.bf16 %v60
    %s62 = scalar_lea.vmem %s1, 12
    %v63 = vld [vmem:[%s62] sm:$0xf]
    %65 = vset.pattern.permute.xlu0 0
    %66 = vperm.xlu0 %65, %v63
    %v67 = vpop.permute.xlu0 %66
    %v69 = vmul.f32 %v61, %v67
    %v70 = vadd.f32 %v57, %v63
    %v71 = vadd.f32 %v58, %v69
    %v72 = vpack.c.bf16 %v71, %v71
    %v77 = vunpack.c.l.b16 %v19
    %v78 = vunpack.c.l.b16 %v20
    %v79 = vunpack.c.l.b16 %v21
    %v80 = vunpack.c.l.b16 %v22
    %v81 = vpack.c.b16 %v78, %v77
    %v82 = vpack.c.b16 %v80, %v79
    %vm85 = vcmask 261120
    %v87 = vsel %vm85, %v72, 0
    %89 = vmatprep.subr.bf16.mxu0 0
    %90 = vmatpush1.bf16.msra.mxu0 %v81
    %91 = vmatprep.subr.bf16.mxu0 0
    %92 = vmatpush1.bf16.msra.mxu0 %v82
    %93 = vmatprep.subr.bf16.mxu0 0
    %94 = vmatpush1.bf16.msra.mxu0 0
    %95 = vmatprep.subr.bf16.mxu0 0
    %96 = vmatpush1.bf16.msra.mxu0 0
    %97 = vmatprep.subr.bf16.mxu0 0
    %98 = vmatpush1.bf16.msra.mxu0 0
    %99 = vmatprep.subr.bf16.mxu0 0
    %100 = vmatpush1.bf16.msra.mxu0 0
    %101 = vmatprep.subr.bf16.mxu0 0
    %102 = vmatpush1.bf16.msra.mxu0 0
    %103 = vmatprep.subr.bf16.mxu0 0
    %104 = vmatpush1.bf16.msra.mxu0 0
    %105 = vmatprep.subr.bf16.mxu0 0
    %106 = vmatpush1.bf16.msra.mxu0 0
    %107 = vmatprep.subr.bf16.mxu0 0
    %108 = vmatpush1.bf16.msra.mxu0 0
    %109 = vmatprep.subr.bf16.mxu0 0
    %110 = vmatpush1.bf16.msra.mxu0 0
    %111 = vmatprep.subr.bf16.mxu0 0
    %112 = vmatpush1.bf16.msra.mxu0 0
    %113 = vmatprep.subr.bf16.mxu0 0
    %114 = vmatpush1.bf16.msra.mxu0 0
    %115 = vmatprep.subr.bf16.mxu0 0
    %116 = vmatpush1.bf16.msra.mxu0 0
    %117 = vmatprep.subr.bf16.mxu0 0
    %118 = vmatpush1.bf16.msra.mxu0 0
    %119 = vmatprep.subr.bf16.mxu0 0
    %120 = vmatpush1.bf16.msra.mxu0 0
    %121 = vmatprep.mubr.bf16.mxu0 0
    %122 = vmatmul.mubr.bf16.gmra.mrb[0].mxu0 %v87
    %v123 = vpop.f32.mrb[0].mxu0
    %v124 = vadd.f32 0.0, %v123
    %v125 = vpop.f32.mrb[0].mxu0
    %v126 = vpop.f32.mrb[0].mxu0
    %v127 = vpop.f32.mrb[0].mxu0
    %128 = vdwg.mxu0
    %v129 = vmul.f32 %v124, 0.25
    %v130 = vmul.f32 %v70, 0.25
    %v132 = vlaneseq
    %v133 = vshrl.u32 %v132, 7
    %v134 = vsub.s32 0, %v133
    %v135 = vrot.slane %v23, %v134
    %138 = vset.pattern.permute.xlu0 0
    %139 = vperm.xlu0 %138, %v130
    %v140 = vpop.permute.xlu0 %139
    %v142 = vmul.f32 %v135, %v140
    %v143 = vadd.f32 %v129, %v142
    %vm144 = vcmask 257024
    %145 = vst.msk [vmem:[#allocation2] sm:$0xf] %vm144, %v143
    // Predicated region
    $region18: #{tpu_custom_call.1} parent=1 // pred_check
      _
    $region19: #{tpu_custom_call.1} parent=1 // pred_check_branch
      %147 = sbr.rel (0) target = $region21
    $region20: #{tpu_custom_call.1} parent=1 // pred_region
      %s149 = ssub.s32 64, 64
      %150 = vsyncadd [#allocation3], %s149
      %s152 = sshll.u32 [#allocation2], 4
      %s153 = int_to_ptr.vmem [resolvable:$true] %s152
      %155 = dma.vmem_to_hbm [thread:$0]  %s153, 64, %s4, [#allocation3]
    $region21: #{tpu_custom_call.1} parent=1 // pred_fallthru
      _
    // Predicated region
    $region22: #{tpu_custom_call.1} parent=1 // pred_check
      _
    $region23: #{tpu_custom_call.1} parent=1 // pred_check_branch
      %157 = sbr.rel (0) target = $region25
    $region24: #{tpu_custom_call.1} parent=1 // pred_region
      %158 = dma.done [#allocation3], 64
    $region25: #{tpu_custom_call.1} parent=1 // pred_fallthru
      _
    %159 = vsyncpa [#allocation3], 1

// kernel: tpu_custom_call.1
$region0: #{tpu_custom_call.1}
  #allocation0 [shape = 'u32[]', space=smem, size = 0x4, offset = 0x4, fixed_abs, tag = 'smem constant byte address 0x4 - core index']
  #allocation1 [shape = 'u32[144,128]{1,0:T(1,128)}', space=vmem, size = 0x12000, scoped, tag = 'internal scratch']
  %s0 = inlined_call_operand.vmem [shape: bf16[4,4,32], index: 0, kind: input, shape index: {}]
  %s1 = inlined_call_operand.vmem [shape: f32[4,4,1], index: 1, kind: input, shape index: {}]
  %s2 = inlined_call_operand.vmem [shape: bf16[32,32], index: 2, kind: input, shape index: {}]
  %s3 = inlined_call_operand.vmem [shape: f32[1,32], index: 3, kind: input, shape index: {}]
  %s4 = inlined_call_operand.hbm [shape: f32[4,32], index: 4, kind: output, shape index: {}]
  %s5 = sld [smem:[#allocation0]]
  $region26: #{tpu_custom_call.1} parent=0
    _
  %s7 = ssub.s32 1, %s5
  %s8 = scalar_select 0, %s7, %s5
  $region1: #{tpu_custom_call.1} parent=0
    #allocation2 [shape = 'u8[2048]{0}', space=vmem, size = 0x800, scoped, tag = 'output window, operand 0, single buffered']
    #allocation3 [shape = 's32[1]{0}', space=sflag, size = 0x4, scoped, tag = 'scoped memory for tpu_custom_call.1']
    %9 = vsyncpa [#allocation3], 0
    // Predicated region
    $region2: #{tpu_custom_call.1} parent=1 // pred_check
      _
    $region3: #{tpu_custom_call.1} parent=1 // pred_check_branch
      %11 = sbr.rel (0) target = $region5
    $region4: #{tpu_custom_call.1} parent=1 // pred_region
      _
    $region5: #{tpu_custom_call.1} parent=1 // pred_fallthru
      _
    // Predicated region
    $region6: #{tpu_custom_call.1} parent=1 // pred_check
      _
    $region7: #{tpu_custom_call.1} parent=1 // pred_check_branch
      %13 = sbr.rel (0) target = $region9
    $region8: #{tpu_custom_call.1} parent=1 // pred_region
      _
    $region9: #{tpu_custom_call.1} parent=1 // pred_fallthru
      _
    // Predicated region
    $region10: #{tpu_custom_call.1} parent=1 // pred_check
      _
    $region11: #{tpu_custom_call.1} parent=1 // pred_check_branch
      %15 = sbr.rel (0) target = $region13
    $region12: #{tpu_custom_call.1} parent=1 // pred_region
      _
    $region13: #{tpu_custom_call.1} parent=1 // pred_fallthru
      _
    // Predicated region
    $region14: #{tpu_custom_call.1} parent=1 // pred_check
      _
    $region15: #{tpu_custom_call.1} parent=1 // pred_check_branch
      %17 = sbr.rel (0) target = $region17
    $region16: #{tpu_custom_call.1} parent=1 // pred_region
      _
    $region17: #{tpu_custom_call.1} parent=1 // pred_fallthru
      _
    %v19 = vld [vmem:[%s2] sm:$0xf]
    %v20 = vld [vmem:[%s2 + $0x4] sm:$0xf]
    %v21 = vld [vmem:[%s2 + $0x8] sm:$0xf]
    %v22 = vld [vmem:[%s2 + $0xc] sm:$0xf]
    %v23 = vld [vmem:[%s3] sm:$0x1]
    %v24 = vld [vmem:[%s0] sm:$0x3]
    %v25 = vunpack.c.l.bf16 %v24
    %v26 = vld [vmem:[%s1] sm:$0xf]
    %28 = vset.pattern.permute.xlu0 0
    %29 = vperm.xlu0 %28, %v26
    %v30 = vpop.permute.xlu0 %29
    %v32 = vmul.f32 %v25, %v30
    %s33 = scalar_lea.vmem %s0, 2
    %v34 = vld [vmem:[%s33] sm:$0x3]
    %v35 = vunpack.c.l.bf16 %v34
    %s36 = scalar_lea.vmem %s1, 4
    %v37 = vld [vmem:[%s36] sm:$0xf]
    %39 = vset.pattern.permute.xlu0 0
    %40 = vperm.xlu0 %39, %v37
    %v41 = vpop.permute.xlu0 %40
    %v43 = vmul.f32 %v35, %v41
    %v44 = vadd.f32 %v26, %v37
    %v45 = vadd.f32 %v32, %v43
    %s46 = scalar_lea.vmem %s0, 4
    %v47 = vld [vmem:[%s46] sm:$0x3]
    %v48 = vunpack.c.l.bf16 %v47
    %s49 = scalar_lea.vmem %s1, 8
    %v50 = vld [vmem:[%s49] sm:$0xf]
    %52 = vset.pattern.permute.xlu0 0
    %53 = vperm.xlu0 %52, %v50
    %v54 = vpop.permute.xlu0 %53
    %v56 = vmul.f32 %v48, %v54
    %v57 = vadd.f32 %v44, %v50
    %v58 = vadd.f32 %v45, %v56
    %s59 = scalar_lea.vmem %s0, 6
    %v60 = vld [vmem:[%s59] sm:$0x3]
    %v61 = vunpack.c.l.bf16 %v60
    %s62 = scalar_lea.vmem %s1, 12
    %v63 = vld [vmem:[%s62] sm:$0xf]
    %65 = vset.pattern.permute.xlu0 0
    %66 = vperm.xlu0 %65, %v63
    %v67 = vpop.permute.xlu0 %66
    %v69 = vmul.f32 %v61, %v67
    %v70 = vadd.f32 %v57, %v63
    %v71 = vadd.f32 %v58, %v69
    %v72 = vpack.c.bf16 %v71, %v71
    %v77 = vunpack.c.l.b16 %v19
    %v78 = vunpack.c.l.b16 %v20
    %v79 = vunpack.c.l.b16 %v21
    %v80 = vunpack.c.l.b16 %v22
    %v81 = vpack.c.b16 %v78, %v77
    %v82 = vpack.c.b16 %v80, %v79
    %vm85 = vcmask 261120
    %v87 = vsel %vm85, %v72, 0
    %89 = vmatprep.subr.bf16.mxu0 0
    %90 = vmatpush1.bf16.msra.mxu0 %v81
    %91 = vmatprep.subr.bf16.mxu0 0
    %92 = vmatpush1.bf16.msra.mxu0 %v82
    %93 = vmatprep.subr.bf16.mxu0 0
    %94 = vmatpush1.bf16.msra.mxu0 0
    %95 = vmatprep.subr.bf16.mxu0 0
    %96 = vmatpush1.bf16.msra.mxu0 0
    %97 = vmatprep.subr.bf16.mxu0 0
    %98 = vmatpush1.bf16.msra.mxu0 0
    %99 = vmatprep.subr.bf16.mxu0 0
    %100 = vmatpush1.bf16.msra.mxu0 0
    %101 = vmatprep.subr.bf16.mxu0 0
    %102 = vmatpush1.bf16.msra.mxu0 0
    %103 = vmatprep.subr.bf16.mxu0 0
    %104 = vmatpush1.bf16.msra.mxu0 0
    %105 = vmatprep.subr.bf16.mxu0 0
    %106 = vmatpush1.bf16.msra.mxu0 0
    %107 = vmatprep.subr.bf16.mxu0 0
    %108 = vmatpush1.bf16.msra.mxu0 0
    %109 = vmatprep.subr.bf16.mxu0 0
    %110 = vmatpush1.bf16.msra.mxu0 0
    %111 = vmatprep.subr.bf16.mxu0 0
    %112 = vmatpush1.bf16.msra.mxu0 0
    %113 = vmatprep.subr.bf16.mxu0 0
    %114 = vmatpush1.bf16.msra.mxu0 0
    %115 = vmatprep.subr.bf16.mxu0 0
    %116 = vmatpush1.bf16.msra.mxu0 0
    %117 = vmatprep.subr.bf16.mxu0 0
    %118 = vmatpush1.bf16.msra.mxu0 0
    %119 = vmatprep.subr.bf16.mxu0 0
    %120 = vmatpush1.bf16.msra.mxu0 0
    %121 = vmatprep.mubr.bf16.mxu0 0
    %122 = vmatmul.mubr.bf16.gmra.mrb[0].mxu0 %v87
    %v123 = vpop.f32.mrb[0].mxu0
    %v124 = vadd.f32 0.0, %v123
    %v125 = vpop.f32.mrb[0].mxu0
    %v126 = vpop.f32.mrb[0].mxu0
    %v127 = vpop.f32.mrb[0].mxu0
    %128 = vdwg.mxu0
    %v129 = vmul.f32 %v124, 0.25
    %v130 = vmul.f32 %v70, 0.25
    %v132 = vlaneseq
    %v133 = vshrl.u32 %v132, 7
    %v134 = vsub.s32 0, %v133
    %v135 = vrot.slane %v23, %v134
    %138 = vset.pattern.permute.xlu0 0
    %139 = vperm.xlu0 %138, %v130
    %v140 = vpop.permute.xlu0 %139
    %v142 = vmul.f32 %v135, %v140
    %v143 = vadd.f32 %v129, %v142
    %vm144 = vcmask 257024
    %145 = vst.msk [vmem:[#allocation2] sm:$0xf] %vm144, %v143
    // Predicated region
    $region18: #{tpu_custom_call.1} parent=1 // pred_check
      _
    $region19: #{tpu_custom_call.1} parent=1 // pred_check_branch
      %147 = sbr.rel (0) target = $region21
    $region20: #{tpu_custom_call.1} parent=1 // pred_region
      %s149 = ssub.s32 64, 64
      %150 = vsyncadd [#allocation3], %s149
      %s152 = sshll.u32 [#allocation2], 4
      %s153 = int_to_ptr.vmem [resolvable:$true] %s152
      %155 = dma.vmem_to_hbm [thread:$0]  %s153, 64, %s4, [#allocation3]
    $region21: #{tpu_custom_call.1} parent=1 // pred_fallthru
      _
    // Predicated region
    $region22: #{tpu_custom_call.1} parent=1 // pred_check
      _
    $region23: #{tpu_custom_call.1} parent=1 // pred_check_branch
      %157 = sbr.rel (0) target = $region25
    $region24: #{tpu_custom_call.1} parent=1 // pred_region
      %158 = dma.done [#allocation3], 64
    $region25: #{tpu_custom_call.1} parent=1 // pred_fallthru
      _
    %159 = vsyncpa [#allocation3], 1

</llo_original>
